<compile_context>
chip_gen: v7x
topology: tpu7x:2x2x1
jax: 0.10.0
libtpu: 0.0.40
codegen_flags: <defaults>
</compile_context>

<pallas_src>
import jax
import jax.numpy as jnp
import numpy as np
from jax.experimental import pallas as pl
from jax.experimental.pallas import tpu as pltpu


def _conv_bn_relu_pool_kernel(cols_ref, w_ref, out_ref):
    """One grid step == T images: fused conv(3x3) + BN + ReLU + global avg pool.

    cols_ref: (K, T*HW)    im2col slab (K = 9*Cin + 1 ones-row), HW lane-dense
    w_ref:    (Cout, K)    conv weights with BN scale folded in; the last
                           column is the folded BN shift (hits the ones-row)
    out_ref:  (1, Cout, T) per-image pooled features
    """
    cout = w_ref.shape[0]
    t = out_ref.shape[2]
    hw = cols_ref.shape[1] // t

    # Single MXU matmul: conv + BN affine in one shot (DEFAULT precision).
    y = jnp.dot(w_ref[...], cols_ref[...],
                preferred_element_type=jnp.float32)            # (Cout, T*HW)
    y = jnp.maximum(y, 0.0)                                    # ReLU

    # AdaptiveAvgPool2d((1,1)) == mean over the HW lanes of each image.
    if t == 1:
        pooled = jnp.mean(y, axis=1, keepdims=True)            # (Cout, 1)
    else:
        pooled = jnp.mean(y.reshape(cout, t, hw), axis=2)      # (Cout, T)

    out_ref[0] = pooled


def json2resnet_forward(x_nchw, w_conv_oihw, bn_gamma, bn_beta, bn_mean,
                        bn_var, fc_w, fc_b, eps=1e-5, images_per_step=None):
    B, Cin, H, W = x_nchw.shape
    Cout = w_conv_oihw.shape[0]
    num_classes = fc_w.shape[0]
    HW = H * W
    K = 9 * Cin + 1                                            # 27 taps + ones row

    # ---- parameter folding: BN (eval) affine folded into the conv weights ----
    scale = (bn_gamma / jnp.sqrt(bn_var + eps)).astype(jnp.float32)    # (Cout,)
    shift = (bn_beta - bn_mean * scale).astype(jnp.float32)            # (Cout,)
    # column index = (kh*3 + kw)*Cin + c  (matches the im2col order below)
    w_mat = jnp.transpose(w_conv_oihw, (0, 2, 3, 1)).reshape(Cout, 9 * Cin)
    w_mat = w_mat.astype(jnp.float32) * scale[:, None]
    w_fold = jnp.concatenate([w_mat, shift[:, None]], axis=1)          # (Cout, K)

    # ---- im2col in XLA, lane-dense (spatial dim last) ----
    xp = jnp.pad(x_nchw.astype(jnp.float32), ((0, 0), (0, 0), (1, 1), (1, 1)))
    patches = [xp[:, :, kh:kh + H, kw:kw + W]
               for kh in range(3) for kw in range(3)]                  # 9 x (B,Cin,H,W)
    cols = jnp.stack(patches, axis=1).reshape(B, 9 * Cin, HW)          # (B, 27, HW)
    cols = jnp.concatenate([cols, jnp.ones((B, 1, HW), jnp.float32)], axis=1)

    # ---- batch tiling: T images per grid step, stacked along the lane (N) axis
    if images_per_step is None:
        images_per_step = max(1, min(B // 2, 64)) if B >= 2 else 1
    T = images_per_step
    G = -(-B // T)                                                     # grid steps
    Bp = G * T
    if Bp != B:
        cols = jnp.pad(cols, ((0, Bp - B), (0, 0), (0, 0)))
    # Lane-block boundaries must be 128-aligned unless there is a single step.
    assert G == 1 or (T * HW) % 128 == 0, (T, HW)

    cols_g = jnp.transpose(cols, (1, 0, 2)).reshape(K, Bp * HW)        # (K, Bp*HW)

    pooled = pl.pallas_call(
        _conv_bn_relu_pool_kernel,
        out_shape=jax.ShapeDtypeStruct((G, Cout, T), jnp.float32),
        grid_spec=pltpu.PrefetchScalarGridSpec(
            num_scalar_prefetch=0,
            grid=(G,),
            in_specs=[
                pl.BlockSpec((K, T * HW), lambda i: (0, i)),
                pl.BlockSpec((Cout, K), lambda i: (0, 0)),
            ],
            out_specs=pl.BlockSpec((1, Cout, T), lambda i: (i, 0, 0)),
        ),
        compiler_params=pltpu.CompilerParams(
            dimension_semantics=("parallel",)),
    )(cols_g, w_fold)

    pooled = jnp.transpose(pooled, (0, 2, 1)).reshape(Bp, Cout)[:B]    # (B, Cout)

    # Final Linear(Cout -> 10): tiny, kept in XLA off the kernel epilogue.
    return pooled @ fc_w.T.astype(jnp.float32) + fc_b.astype(jnp.float32)


def reference_forward(x_nchw, w_conv_oihw, bn_gamma, bn_beta, bn_mean, bn_var,
                      fc_w, fc_b, eps=1e-5):
    """Pure-JAX reference (matches PyTorch eval-mode semantics)."""
    x_nhwc = jnp.transpose(x_nchw, (0, 2, 3, 1))
    w_hwio = jnp.transpose(w_conv_oihw, (2, 3, 1, 0))
    y = jax.lax.conv_general_dilated(
        x_nhwc, w_hwio, window_strides=(1, 1), padding="SAME",
        dimension_numbers=("NHWC", "HWIO", "NHWC"),
        precision=jax.lax.Precision.HIGHEST)
    y = (y - bn_mean) / jnp.sqrt(bn_var + eps) * bn_gamma + bn_beta
    y = jnp.maximum(y, 0.0)
    pooled = jnp.mean(y, axis=(1, 2))                                  # (B, Cout)
    return pooled @ fc_w.T + fc_b


if __name__ == "__main__":
    B, Cin, H, W = 2, 3, 16, 16
    Cout = 8            # filters
    num_classes = 10

    key = jax.random.PRNGKey(0)
    k_x, k_conv, k_fcw, k_fcb = jax.random.split(key, 4)

    x = jax.random.normal(k_x, (B, Cin, H, W), dtype=jnp.float32)

    # Conv2d weight (Cout, Cin, 3, 3), kaiming-normal-ish (fan_out) init.
    fan_out = Cout * 3 * 3
    w_conv = jax.random.normal(k_conv, (Cout, Cin, 3, 3), jnp.float32) * np.sqrt(2.0 / fan_out)

    # BatchNorm2d params as set in __init__ (weight=1, bias=0) + default running stats.
    bn_gamma = jnp.ones((Cout,), jnp.float32)
    bn_beta = jnp.zeros((Cout,), jnp.float32)
    bn_mean = jnp.zeros((Cout,), jnp.float32)
    bn_var = jnp.ones((Cout,), jnp.float32)

    # Linear(Cout -> 10), deterministic init.
    fc_w = jax.random.normal(k_fcw, (num_classes, Cout), jnp.float32) * (1.0 / np.sqrt(Cout))
    fc_b = jax.random.normal(k_fcb, (num_classes,), jnp.float32) * 0.01

    out = json2resnet_forward(x, w_conv, bn_gamma, bn_beta, bn_mean, bn_var, fc_w, fc_b)
    out = jax.block_until_ready(out)

    ref = reference_forward(x, w_conv, bn_gamma, bn_beta, bn_mean, bn_var, fc_w, fc_b)
    ref = jax.block_until_ready(ref)

    assert out.shape == (B, num_classes), out.shape
    np.testing.assert_allclose(np.asarray(out), np.asarray(ref), rtol=2e-3, atol=2e-3)
    print("KERNEL_OK")
</pallas_src>

<mosaic_0001>
module attributes {stable_mosaic.version = 11 : i64} {
  func.func @_conv_bn_relu_pool_kernel(%arg0: i32, %arg1: memref<28x256xf32, #tpu.memory_space<vmem>>, %arg2: memref<8x28xf32, #tpu.memory_space<vmem>>, %arg3: memref<1x8x1xf32, #tpu.memory_space<vmem>>) attributes {dimension_semantics = [#tpu.dimension_semantics<parallel>], iteration_bounds = array<i64: 2>, scalar_prefetch = 0 : i64, scratch_operands = 0 : i64, tpu.core_type = #tpu.core_type<tc>, window_params = [{transform_indices = @transform_0, window_bounds = array<i64: 28, 256>}, {pipeline_mode = #tpu.pipeline_mode<synchronous>, transform_indices = @transform_1, window_bounds = array<i64: 8, 28>}, {transform_indices = @transform_2, window_bounds = array<i64: 1, 8, 1>}]} {
    %c0 = arith.constant 0 : index
    %c0_0 = arith.constant 0 : index
    %0 = vector.load %arg2[%c0, %c0_0] : memref<8x28xf32, #tpu.memory_space<vmem>>, vector<8x28xf32>
    %c0_1 = arith.constant 0 : index
    %c0_2 = arith.constant 0 : index
    %1 = vector.load %arg1[%c0_1, %c0_2] : memref<28x256xf32, #tpu.memory_space<vmem>>, vector<28x256xf32>
    %cst = arith.constant dense<0.000000e+00> : vector<8x256xf32>
    %2 = tpu.matmul %0, %1, %cst {dimension_numbers = #tpu.dot_dimension_numbers<[1], [0], [0], [1], [0, 0, 1, 1], [], []>} : vector<8x28xf32>, vector<28x256xf32>, vector<8x256xf32> -> vector<8x256xf32>
    %cst_3 = arith.constant 0.000000e+00 : f32
    %3 = vector.broadcast %cst_3 : f32 to vector<8x256xf32>
    %4 = arith.maximumf %2, %3 : vector<8x256xf32>
    %cst_4 = arith.constant dense<0.000000e+00> : vector<8xf32>
    %5 = vector.multi_reduction <add>, %4, %cst_4 [1] : vector<8x256xf32> to vector<8xf32>
    %6 = vector.shape_cast %5 : vector<8xf32> to vector<8x1xf32>
    %cst_5 = arith.constant 2.560000e+02 : f32
    %7 = vector.broadcast %cst_5 : f32 to vector<8x1xf32>
    %8 = arith.divf %6, %7 : vector<8x1xf32>
    %c0_6 = arith.constant 0 : index
    %c0_7 = arith.constant 0 : index
    %c0_8 = arith.constant 0 : index
    %9 = vector.load %arg3[%c0_6, %c0_7, %c0_8] : memref<1x8x1xf32, #tpu.memory_space<vmem>>, vector<1x8x1xf32>
    %10 = vector.shape_cast %9 : vector<1x8x1xf32> to vector<8x1xf32>
    %11 = vector.shape_cast %8 : vector<8x1xf32> to vector<1x8x1xf32>
    tpu.vector_store %arg3[%c0_6, %c0_7, %c0_8], %11 {strides = array<i32>} : memref<1x8x1xf32, #tpu.memory_space<vmem>>, vector<1x8x1xf32>,
    return
  }
  func.func @transform_0(%arg0: i32) -> (i32, i32) {
    %c0_i32 = arith.constant 0 : i32
    %c0_i32_0 = arith.constant 0 : i32
    return %c0_i32, %arg0 : i32, i32
  }
  func.func @transform_1(%arg0: i32) -> (i32, i32) {
    %c0_i32 = arith.constant 0 : i32
    %c0_i32_0 = arith.constant 0 : i32
    %c0_i32_1 = arith.constant 0 : i32
    return %c0_i32, %c0_i32_0 : i32, i32
  }
  func.func @transform_2(%arg0: i32) -> (i32, i32, i32) {
    %c0_i32 = arith.constant 0 : i32
    %c0_i32_0 = arith.constant 0 : i32
    %c0_i32_1 = arith.constant 0 : i32
    return %arg0, %c0_i32, %c0_i32_0 : i32, i32, i32
  }
}

</mosaic_0001>

<llo_original>
// kernel: tpu_custom_call.1
$region0: #{tpu_custom_call.1}
  #allocation0 [shape = 'u32[]', space=smem, size = 0x4, offset = 0x4, fixed_abs, tag = 'smem constant byte address 0x4 - core index']
  #allocation1 [shape = 'u32[144,128]{1,0:T(1,128)}', space=vmem, size = 0x12000, scoped, tag = 'internal scratch']
  %s0 = inlined_call_operand.hbm [shape: f32[28,512], index: 0, kind: input, shape index: {}]
  %s1 = inlined_call_operand.hbm [shape: f32[8,28], index: 1, kind: input, shape index: {}]
  %s2 = inlined_call_operand.vmem [shape: f32[2,8,1], index: 2, kind: output, shape index: {}]
  %s3 = sld [smem:[#allocation0]]
  $region49: #{tpu_custom_call.1} parent=0
    _
  %s5 = ssub.s32 1, %s3
  %s6 = scalar_select 0, %s5, %s3
  $region1: #{tpu_custom_call.1} parent=0
    #allocation2 [shape = 'u8[65536]{0}', space=vmem, size = 0x10000, scoped, tag = 'input window, operand 0']
    #allocation3 [shape = 's32[2]{0}', space=sflag, size = 0x8, scoped, tag = 'scoped memory for tpu_custom_call.1']
    #allocation4 [shape = 'u8[4096]{0}', space=vmem, size = 0x1000, scoped, tag = 'input window, operand 1, single buffered']
    #allocation5 [shape = 's32[1]{0}', space=sflag, size = 0x4, scoped, tag = 'scoped memory for tpu_custom_call.1']
    %7 = vsyncpa [#allocation3], 0
    %s8 = scalar_lea.sflag [#allocation3], 1
    %9 = vsyncpa %s8, 0
    %10 = vsyncpa [#allocation5], 0
    loop: start=0, step=1, limit=4
    $region2: #{tpu_custom_call.1} parent=1 // loop_pre_header
      _
    $region3: #{tpu_custom_call.1} parent=1 // loop_header
      %s12 = sphi 0, %s16
      %p13 = scmp.ge.s32.totalorder %s12, 4
      %s22 = sphi 0, %s24
      %s25 = sphi 0, %s22
      %s26 = sphi 0, %s25
      %s42 = sphi 0, %s26
      %s46 = sphi 0, %s46
      %s48 = sphi 0, %s46
      %s49 = sphi 0, %s48
      %s63 = sphi 0, %s49
      %s69 = sphi 0, %s71
      %s72 = sphi 0, %s69
      %s73 = sphi 0, %s72
      %s89 = sphi 0, %s73
    $region4: #{tpu_custom_call.1} parent=1 // loop_header_branch
      %15 = sbr.rel (%p13) target = $region8
    $region5: #{tpu_custom_call.1} parent=1 // loop_body
      %s17 = ssub.s32 %s12, 1
      %s18 = ssub.s32 %s12, 2
      %s19 = sadd.s32 %s12, 1
      %s20 = ssub.s32 %s12, %s19
      %p21 = scmp.eq.s32.totalorder %s20, 0
      %s23 = sadd.s32 %s22, 1
      %s24 = scalar_select %p21, %s22, %s23
      %p27 = pneg %p21
      %p28 = scmp.eq.s32.totalorder %s12, 1
      %p29 = por %p27, %p28
      %p30 = scmp.ne.s32.totalorder %s22, %s25
      %p31 = scmp.eq.s32.totalorder %s12, 0
      %p32 = por %p30, %p31
      %p33 = scmp.ne.s32.totalorder %s22, %s25
      %p34 = scmp.eq.s32.totalorder %s17, 1
      %p35 = por %p33, %p34
      %p36 = scmp.ne.s32.totalorder %s25, %s26
      %p37 = scmp.eq.s32.totalorder %s17, 0
      %p38 = por %p36, %p37
      %p39 = scmp.ne.s32.totalorder %s25, %s26
      %p40 = scmp.eq.s32.totalorder %s18, 1
      %p41 = por %p39, %p40
      %p43 = scmp.ne.s32.totalorder %s26, %s42
      %p44 = scmp.eq.s32.totalorder %s18, 0
      %p45 = por %p43, %p44
      %s47 = sadd.s32 %s46, 1
      %p50 = scmp.eq.s32.totalorder %s12, 1
      %p51 = scmp.ne.s32.totalorder %s46, %s48
      %p52 = scmp.eq.s32.totalorder %s12, 0
      %p53 = por %p51, %p52
      %p54 = scmp.ne.s32.totalorder %s46, %s48
      %p55 = scmp.eq.s32.totalorder %s17, 1
      %p56 = por %p54, %p55
      %p57 = scmp.ne.s32.totalorder %s48, %s49
      %p58 = scmp.eq.s32.totalorder %s17, 0
      %p59 = por %p57, %p58
      %p60 = scmp.ne.s32.totalorder %s48, %s49
      %p61 = scmp.eq.s32.totalorder %s18, 1
      %p62 = por %p60, %p61
      %p64 = scmp.ne.s32.totalorder %s49, %s63
      %p65 = scmp.eq.s32.totalorder %s18, 0
      %p66 = por %p64, %p65
      %s67 = ssub.s32 %s12, %s19
      %p68 = scmp.eq.s32.totalorder %s67, 0
      %s70 = sadd.s32 %s69, 1
      %s71 = scalar_select %p68, %s69, %s70
      %p74 = pneg %p68
      %p75 = scmp.eq.s32.totalorder %s12, 1
      %p76 = por %p74, %p75
      %p77 = scmp.ne.s32.totalorder %s69, %s72
      %p78 = scmp.eq.s32.totalorder %s12, 0
      %p79 = por %p77, %p78
      %p80 = scmp.ne.s32.totalorder %s69, %s72
      %p81 = scmp.eq.s32.totalorder %s17, 1
      %p82 = por %p80, %p81
      %p83 = scmp.ne.s32.totalorder %s72, %s73
      %p84 = scmp.eq.s32.totalorder %s17, 0
      %p85 = por %p83, %p84
      %p86 = scmp.ne.s32.totalorder %s72, %s73
      %p87 = scmp.eq.s32.totalorder %s18, 1
      %p88 = por %p86, %p87
      %p90 = scmp.ne.s32.totalorder %s73, %s89
      %p91 = scmp.eq.s32.totalorder %s18, 0
      %p92 = por %p90, %p91
      %p93 = scmp.le.s32.totalorder 1, %s12
      %p94 = scmp.lt.s32.totalorder %s12, 3
      %p95 = pnand %p93, %p94
      %p96 = pneg %p95
      // Predicated region
      $region9: #{tpu_custom_call.1} parent=5 // pred_check
        _
      $region10: #{tpu_custom_call.1} parent=5 // pred_check_branch
        %98 = sbr.rel (%p95) target = $region12
      $region11: #{tpu_custom_call.1} parent=5 // pred_region
        %s99 = ssub.s32 %s12, 1
        // Predicated region
        $region13: #{tpu_custom_call.1} parent=11 // pred_check
          %p100 = pneg %p59
        $region14: #{tpu_custom_call.1} parent=11 // pred_check_branch
          %102 = sbr.rel (%p100) target = $region16
        $region15: #{tpu_custom_call.1} parent=11 // pred_region
          %s104 = ssub.s32 128, 128
          %105 = vsyncadd [#allocation5], %s104
          %s107 = sshll.u32 [#allocation4], 4
          %s108 = int_to_ptr.vmem [resolvable:$true] %s107
          %110 = dma.hbm_to_vmem [thread:$0]  %s1, 128, %s108, [#allocation5]
        $region16: #{tpu_custom_call.1} parent=11 // pred_fallthru
          _
      $region12: #{tpu_custom_call.1} parent=5 // pred_fallthru
        _
      %p111 = scmp.lt.s32.totalorder %s12, 2
      // Predicated region
      $region17: #{tpu_custom_call.1} parent=5 // pred_check
        %p112 = pneg %p111
      $region18: #{tpu_custom_call.1} parent=5 // pred_check_branch
        %114 = sbr.rel (%p112) target = $region20
      $region19: #{tpu_custom_call.1} parent=5 // pred_region
        // Predicated region
        $region21: #{tpu_custom_call.1} parent=19 // pred_check
          %p115 = pneg %p32
        $region22: #{tpu_custom_call.1} parent=19 // pred_check_branch
          %117 = sbr.rel (%p115) target = $region24
        $region23: #{tpu_custom_call.1} parent=19 // pred_region
          %s118 = sand.u32 %s22, 1
          %s119 = scalar_lea.sflag [#allocation3], %s118
          %s120 = sand.u32 %s22, 1
          %s121 = smul.addr %s120, 64
          %s122 = scalar_lea.vmem [#allocation2], %s121
          %s123 = smul.u32 2, %s12
          %s125 = ssub.s32 1024, 1024
          %126 = vsyncadd %s119, %s125
          %s127 = smul.addr %s123, 128
          %s128 = scalar_lea.hbm %s0, %s127
          %s129 = sshll.u32 %s122, 4
          %s130 = int_to_ptr.vmem [resolvable:$true] %s129
          %135 = dma.hbm_to_vmem [thread:$0]  %s128, 1024, %s130, %s119, 512, 256, 16
        $region24: #{tpu_custom_call.1} parent=19 // pred_fallthru
          _
      $region20: #{tpu_custom_call.1} parent=5 // pred_fallthru
        _
      %p136 = scmp.le.s32.totalorder 1, %s12
      %p137 = scmp.lt.s32.totalorder %s12, 3
      %p138 = pnand %p136, %p137
      %p139 = pneg %p138
      // Predicated region
      $region25: #{tpu_custom_call.1} parent=5 // pred_check
        _
      $region26: #{tpu_custom_call.1} parent=5 // pred_check_branch
        %141 = sbr.rel (%p138) target = $region28
      $region27: #{tpu_custom_call.1} parent=5 // pred_region
        %s142 = ssub.s32 %s12, 1
        %s143 = sand.u32 %s25, 1
        %s144 = scalar_lea.sflag [#allocation3], %s143
        %s145 = sand.u32 %s25, 1
        %s146 = smul.addr %s145, 64
        %s147 = scalar_lea.vmem [#allocation2], %s146
        // Predicated region
        $region29: #{tpu_custom_call.1} parent=27 // pred_check
          %p148 = pneg %p38
        $region30: #{tpu_custom_call.1} parent=27 // pred_check_branch
          %150 = sbr.rel (%p148) target = $region32
        $region31: #{tpu_custom_call.1} parent=27 // pred_region
          %151 = dma.done %s144, 1024
        $region32: #{tpu_custom_call.1} parent=27 // pred_fallthru
          _
        // Predicated region
        $region33: #{tpu_custom_call.1} parent=27 // pred_check
          %p152 = pneg %p59
        $region34: #{tpu_custom_call.1} parent=27 // pred_check_branch
          %154 = sbr.rel (%p152) target = $region36
        $region35: #{tpu_custom_call.1} parent=27 // pred_region
          %155 = dma.done [#allocation5], 128
        $region36: #{tpu_custom_call.1} parent=27 // pred_fallthru
          _
        %s156 = sand.u32 %s25, 1
        %s157 = scalar_lea.sflag [#allocation3], %s156
        %s158 = sand.u32 %s25, 1
        %s159 = smul.addr %s158, 64
        %s160 = scalar_lea.vmem [#allocation2], %s159
        %p161 = pneg %p38
        %p162 = pneg %p35
        %p163 = pneg %p59
        %p164 = pneg %p56
        %p165 = pneg %p85
        %p166 = pneg %p82
        %p167 = scmp.lt.s32.totalorder %s17, 1
        %s168 = scalar_select %p167, %s17, 1
        %s169 = smul.addr %s168, 8
        %s170 = scalar_lea.vmem %s2, %s169
        %s171 = smul.u32 2, %s17
        %p172 = scmp.lt.s32.totalorder %s17, 1
        %s173 = scalar_select %p172, %s17, 1
        %s174 = smul.addr %s173, 8
        %s175 = scalar_lea.vmem %s2, %s174
        %v176 = vld [vmem:[#allocation4] sm:$0xff]
        %v177 = vld [vmem:[%s147] sm:$0xff]
        %v178 = vld [vmem:[%s147 + $0x8] sm:$0xff]
        %v179 = vld [vmem:[%s147 + $0x10] sm:$0xff]
        %v180 = vld [vmem:[%s147 + $0x18] sm:$0xff]
        %v181 = vld [vmem:[%s147 + $0x20] sm:$0xff]
        %v182 = vld [vmem:[%s147 + $0x28] sm:$0xff]
        %v183 = vld [vmem:[%s147 + $0x30] sm:$0xf]
        %v184 = vld [vmem:[%s147 + $0x38] sm:$0xf]
        %vm185 = vcmask 228352
        %v187 = vsel %vm185, %v176, 0
        %vm189 = vcmask 1043456
        %v191 = vsel %vm189, %v183, 0
        %v194 = vsel %vm189, %v184, 0
        %196 = vmatprep.subr.mxu0 %v178
        %197 = vmatpush1.msra.mxu0 %v177
        %198 = vmatprep.subr.mxu0 %v180
        %199 = vmatpush1.msra.mxu0 %v179
        %200 = vmatprep.subr.mxu0 %v182
        %201 = vmatpush1.msra.mxu0 %v181
        %202 = vmatprep.subr.mxu0 %v194
        %203 = vmatpush1.msra.mxu0 %v191
        %204 = vmatprep.subr.mxu0 0.0
        %205 = vmatpush1.msra.mxu0 0.0
        %206 = vmatprep.subr.mxu0 0.0
        %207 = vmatpush1.msra.mxu0 0.0
        %208 = vmatprep.subr.mxu0 0.0
        %209 = vmatpush1.msra.mxu0 0.0
        %210 = vmatprep.subr.mxu0 0.0
        %211 = vmatpush1.msra.mxu0 0.0
        %212 = vmatprep.subr.mxu0 0.0
        %213 = vmatpush1.msra.mxu0 0.0
        %214 = vmatprep.subr.mxu0 0.0
        %215 = vmatpush1.msra.mxu0 0.0
        %216 = vmatprep.subr.mxu0 0.0
        %217 = vmatpush1.msra.mxu0 0.0
        %218 = vmatprep.subr.mxu0 0.0
        %219 = vmatpush1.msra.mxu0 0.0
        %220 = vmatprep.subr.mxu0 0.0
        %221 = vmatpush1.msra.mxu0 0.0
        %222 = vmatprep.subr.mxu0 0.0
        %223 = vmatpush1.msra.mxu0 0.0
        %224 = vmatprep.subr.mxu0 0.0
        %225 = vmatpush1.msra.mxu0 0.0
        %226 = vmatprep.subr.mxu0 0.0
        %227 = vmatpush1.msra.mxu0 0.0
        %228 = vmatprep.subr.mxu0 0.0
        %229 = vmatpush1.msra.mxu0 0.0
        %230 = vmatprep.subr.mxu0 0.0
        %231 = vmatpush1.msra.mxu0 0.0
        %232 = vmatprep.subr.mxu0 0.0
        %233 = vmatpush1.msra.mxu0 0.0
        %234 = vmatprep.subr.mxu0 0.0
        %235 = vmatpush1.msra.mxu0 0.0
        %236 = vmatprep.subr.mxu0 0.0
        %237 = vmatpush1.msra.mxu0 0.0
        %238 = vmatprep.subr.mxu0 0.0
        %239 = vmatpush1.msra.mxu0 0.0
        %240 = vmatprep.subr.mxu0 0.0
        %241 = vmatpush1.msra.mxu0 0.0
        %242 = vmatprep.subr.mxu0 0.0
        %243 = vmatpush1.msra.mxu0 0.0
        %244 = vmatprep.subr.mxu0 0.0
        %245 = vmatpush1.msra.mxu0 0.0
        %246 = vmatprep.subr.mxu0 0.0
        %247 = vmatpush1.msra.mxu0 0.0
        %248 = vmatprep.subr.mxu0 0.0
        %249 = vmatpush1.msra.mxu0 0.0
        %250 = vmatprep.subr.mxu0 0.0
        %251 = vmatpush1.msra.mxu0 0.0
        %252 = vmatprep.subr.mxu0 0.0
        %253 = vmatpush1.msra.mxu0 0.0
        %254 = vmatprep.subr.mxu0 0.0
        %255 = vmatpush1.msra.mxu0 0.0
        %256 = vmatprep.subr.mxu0 0.0
        %257 = vmatpush1.msra.mxu0 0.0
        %258 = vmatprep.subr.mxu0 0.0
        %259 = vmatpush1.msra.mxu0 0.0
        %260 = vmatprep.mubr.f32.mxu0 0.0
        %261 = vmatmul.mubr.f32.gmra.mrb[0].mxu0 %v187
        %v262 = vpop.f32.mrb[0].mxu0
        %v263 = vadd.f32 0.0, %v262
        %v264 = vpop.f32.mrb[0].mxu0
        %v265 = vadd.f32 0.0, %v264
        %266 = vdwg.mxu0
        %v267 = vmax.f32 %v263, 0.0
        %v268 = vmax.f32 %v265, 0.0
        %v269 = vadd.f32 %v267, %v268
        %270 = vadd.xlane.f32.xlu0 %v269
        %v271 = vpop.xlane.xlu0 %270
        %v272 = vrcp.pop 256.0
        %v273 = vmul.f32 %v271, %v272
        %vm274 = vcmask 7168
        %275 = vst.msk [vmem:[%s175] sm:$0xff] %vm274, %v273
        %p276 = scmp.lt.s32.totalorder %s17, 1
        %s277 = scalar_select %p276, %s17, 1
        %s278 = smul.addr %s277, 8
        %s279 = scalar_lea.vmem %s2, %s278
        // Predicated region
        $region37: #{tpu_custom_call.1} parent=27 // pred_check
          %p280 = pneg %p82
        $region38: #{tpu_custom_call.1} parent=27 // pred_check_branch
          %282 = sbr.rel (%p280) target = $region40
        $region39: #{tpu_custom_call.1} parent=27 // pred_region
          _
        $region40: #{tpu_custom_call.1} parent=27 // pred_fallthru
          _
      $region28: #{tpu_custom_call.1} parent=5 // pred_fallthru
        _
      %p283 = scmp.le.s32.totalorder 2, %s12
      // Predicated region
      $region41: #{tpu_custom_call.1} parent=5 // pred_check
        %p284 = pneg %p283
      $region42: #{tpu_custom_call.1} parent=5 // pred_check_branch
        %286 = sbr.rel (%p284) target = $region44
      $region43: #{tpu_custom_call.1} parent=5 // pred_region
        %s287 = ssub.s32 %s12, 2
        // Predicated region
        $region45: #{tpu_custom_call.1} parent=43 // pred_check
          %p288 = pneg %p88
        $region46: #{tpu_custom_call.1} parent=43 // pred_check_branch
          %290 = sbr.rel (%p288) target = $region48
        $region47: #{tpu_custom_call.1} parent=43 // pred_region
          %p291 = scmp.lt.s32.totalorder %s18, 1
          %s292 = scalar_select %p291, %s18, 1
          %s293 = smul.addr %s292, 8
          %s294 = scalar_lea.vmem %s2, %s293
        $region48: #{tpu_custom_call.1} parent=43 // pred_fallthru
          _
      $region44: #{tpu_custom_call.1} parent=5 // pred_fallthru
        _
    $region6: #{tpu_custom_call.1} parent=1 // loop_footer
      %s16 = sadd.s32 1, %s12
    $region7: #{tpu_custom_call.1} parent=1 // loop_footer_branch
      %11 = sbr.rel target = $region3
    $region8: #{tpu_custom_call.1} parent=1 // loop_exit
      _
    %295 = vsyncpa [#allocation3], 1
    %s296 = scalar_lea.sflag [#allocation3], 1
    %297 = vsyncpa %s296, 1
    %298 = vsyncpa [#allocation5], 1

</llo_original>
